<compile_context>
chip_gen: v6e
topology: v6e:2x2x1
jax: 0.10.0
libtpu: 0.0.40
codegen_flags: <defaults>
</compile_context>

<pallas_src>
import functools
import math

import jax
import jax.numpy as jnp
from jax.experimental import pallas as pl
from jax.experimental.pallas import tpu as pltpu


def token_dropout_kernel(x_ref, rand_ref, out_ref, *, threshold, fill_token):
    x = x_ref[...]
    keep = rand_ref[...] > threshold            # integer threshold compare
    fill = jnp.asarray(fill_token, dtype=x.dtype)  # scalar select operand, no full tile
    out_ref[...] = jnp.where(keep, x, fill)


def _pick_block(dim, target, align):
    """Largest legal tile <= target along one axis ((8,128) tiling constraint)."""
    if dim <= target:
        return dim                              # full extent is always legal
    return max(align, (target // align) * align)


def token_dropout(x, key, *, token_dropout_p, fill_token,
                  block_rows=256, block_cols=2048):
    assert 0.0 < token_dropout_p < 1.0, "Token dropout must be between 0 and 1"
    B, T = x.shape

    # Uniform int32 in [0, 2^31): prob == rand / 2^31.  Keep where prob > p
    # <=> rand > floor(p * 2^31), matching the PyTorch strict '>' semantics.
    rand = (jax.random.bits(key, (B, T), dtype=jnp.uint32) >> 1).astype(jnp.int32)
    threshold = min(int(math.floor(token_dropout_p * (1 << 31))), (1 << 31) - 1)

    br = _pick_block(B, block_rows, 8)
    bc = _pick_block(T, block_cols, 128)
    grid = (pl.cdiv(B, br), pl.cdiv(T, bc))
    spec = pl.BlockSpec((br, bc), lambda i, j: (i, j))

    kernel = functools.partial(
        token_dropout_kernel,
        threshold=threshold,
        fill_token=int(fill_token),
    )
    return pl.pallas_call(
        kernel,
        out_shape=jax.ShapeDtypeStruct(x.shape, x.dtype),
        grid=grid,
        in_specs=[spec, spec],
        out_specs=spec,
        compiler_params=pltpu.CompilerParams(
            dimension_semantics=("parallel", "parallel")),
    )(x, rand)


if __name__ == "__main__":
    key = jax.random.PRNGKey(0)

    B, T = 8, 128          # (batch, seq) — matches the module's (shape[0], shape[1])
    VOCAB = 1000
    TOKEN_DROPOUT = 0.3
    FILL_TOKEN = 0         # e.g. <pad>/<mask> id

    k_tok, k_drop = jax.random.split(key)
    x = jax.random.randint(k_tok, (B, T), 1, VOCAB, dtype=jnp.int32)

    out = token_dropout(x, k_drop, token_dropout_p=TOKEN_DROPOUT, fill_token=FILL_TOKEN)
    out = jax.block_until_ready(out)

    # Sanity: every position is either the original token or the fill token,
    # and roughly TOKEN_DROPOUT fraction got replaced.
    replaced = (out == FILL_TOKEN) & (x != FILL_TOKEN)
    kept = out == x
    assert bool(jnp.all(replaced | kept))
    frac = float(jnp.mean(replaced.astype(jnp.float32)))
    assert 0.15 < frac < 0.45, f"unexpected dropout fraction {frac}"

    print("KERNEL_OK")
</pallas_src>

<mosaic_0001>
module attributes {stable_mosaic.version = 11 : i64} {
  func.func @token_dropout_kernel(%arg0: i32, %arg1: i32, %arg2: memref<8x128xi32, #tpu.memory_space<vmem>>, %arg3: memref<8x128xi32, #tpu.memory_space<vmem>>, %arg4: memref<8x128xi32, #tpu.memory_space<vmem>>) attributes {dimension_semantics = [#tpu.dimension_semantics<parallel>, #tpu.dimension_semantics<parallel>], iteration_bounds = array<i64: 1, 1>, scalar_prefetch = 0 : i64, scratch_operands = 0 : i64, tpu.core_type = #tpu.core_type<tc>, window_params = [{transform_indices = @transform_0, window_bounds = array<i64: 8, 128>}, {transform_indices = @transform_1, window_bounds = array<i64: 8, 128>}, {transform_indices = @transform_2, window_bounds = array<i64: 8, 128>}]} {
    %c0 = arith.constant 0 : index
    %c0_0 = arith.constant 0 : index
    %0 = vector.load %arg2[%c0, %c0_0] : memref<8x128xi32, #tpu.memory_space<vmem>>, vector<8x128xi32>
    %c0_1 = arith.constant 0 : index
    %c0_2 = arith.constant 0 : index
    %1 = vector.load %arg3[%c0_1, %c0_2] : memref<8x128xi32, #tpu.memory_space<vmem>>, vector<8x128xi32>
    %c644245094_i32 = arith.constant 644245094 : i32
    %2 = vector.broadcast %c644245094_i32 : i32 to vector<8x128xi32>
    %3 = arith.cmpi sgt, %1, %2 : vector<8x128xi32>
    %c0_i32 = arith.constant 0 : i32
    %4 = vector.broadcast %c0_i32 : i32 to vector<8x128xi32>
    %5 = arith.select %3, %0, %4 : vector<8x128xi1>, vector<8x128xi32>
    %c0_3 = arith.constant 0 : index
    %c0_4 = arith.constant 0 : index
    %6 = vector.load %arg4[%c0_3, %c0_4] : memref<8x128xi32, #tpu.memory_space<vmem>>, vector<8x128xi32>
    tpu.vector_store %arg4[%c0_3, %c0_4], %5 {strides = array<i32>} : memref<8x128xi32, #tpu.memory_space<vmem>>, vector<8x128xi32>,
    return
  }
  func.func @transform_0(%arg0: i32, %arg1: i32) -> (i32, i32) {
    %c0_i32 = arith.constant 0 : i32
    return %arg0, %arg1 : i32, i32
  }
  func.func @transform_1(%arg0: i32, %arg1: i32) -> (i32, i32) {
    %c0_i32 = arith.constant 0 : i32
    return %arg0, %arg1 : i32, i32
  }
  func.func @transform_2(%arg0: i32, %arg1: i32) -> (i32, i32) {
    %c0_i32 = arith.constant 0 : i32
    return %arg0, %arg1 : i32, i32
  }
}

</mosaic_0001>

<llo_original>
// kernel: tpu_custom_call.1
$region0: #{tpu_custom_call.1}
  #allocation0 [shape = 'u32[]', space=smem, size = 0x4, offset = 0x4, fixed_abs, tag = 'smem constant byte address 0x4 - core index']
  #allocation1 [shape = 'u32[144,128]{1,0:T(1,128)}', space=vmem, size = 0x12000, scoped, tag = 'internal scratch']
  %s0 = inlined_call_operand.hbm [shape: s32[8,128], index: 0, kind: input, shape index: {}]
  %s1 = inlined_call_operand.hbm [shape: s32[8,128], index: 1, kind: input, shape index: {}]
  %s2 = inlined_call_operand.hbm [shape: s32[8,128], index: 2, kind: output, shape index: {}]
  %s3 = sld [smem:[#allocation0]]
  $region26: #{tpu_custom_call.1} parent=0
    _
  %s5 = ssub.s32 1, %s3
  %s6 = scalar_select 0, %s5, %s3
  $region1: #{tpu_custom_call.1} parent=0
    #allocation2 [shape = 'u8[4096]{0}', space=vmem, size = 0x1000, scoped, tag = 'input window, operand 0, single buffered']
    #allocation3 [shape = 's32[1]{0}', space=sflag, size = 0x4, scoped, tag = 'scoped memory for tpu_custom_call.1']
    #allocation4 [shape = 's32[1]{0}', space=sflag, size = 0x4, scoped, tag = 'scoped memory for tpu_custom_call.1']
    #allocation5 [shape = 'u8[4096]{0}', space=vmem, size = 0x1000, scoped, tag = 'input window, operand 1, single buffered']
    #allocation6 [shape = 's32[1]{0}', space=sflag, size = 0x4, scoped, tag = 'scoped memory for tpu_custom_call.1']
    #allocation7 [shape = 'u8[4096]{0}', space=vmem, size = 0x1000, scoped, tag = 'output window, operand 0, single buffered']
    %7 = vsyncpa [#allocation3], 0
    %8 = vsyncpa [#allocation6], 0
    %9 = vsyncpa [#allocation4], 0
    // Predicated region
    $region2: #{tpu_custom_call.1} parent=1 // pred_check
      _
    $region3: #{tpu_custom_call.1} parent=1 // pred_check_branch
      %11 = sbr.rel (0) target = $region5
    $region4: #{tpu_custom_call.1} parent=1 // pred_region
      %s13 = ssub.s32 128, 128
      %14 = vsyncadd [#allocation3], %s13
      %s16 = sshll.u32 [#allocation2], 4
      %s17 = int_to_ptr.vmem [resolvable:$true] %s16
      %19 = dma.hbm_to_vmem [thread:$0]  %s0, 128, %s17, [#allocation3]
    $region5: #{tpu_custom_call.1} parent=1 // pred_fallthru
      _
    // Predicated region
    $region6: #{tpu_custom_call.1} parent=1 // pred_check
      _
    $region7: #{tpu_custom_call.1} parent=1 // pred_check_branch
      %21 = sbr.rel (0) target = $region9
    $region8: #{tpu_custom_call.1} parent=1 // pred_region
      %s23 = ssub.s32 128, 128
      %24 = vsyncadd [#allocation6], %s23
      %s26 = sshll.u32 [#allocation5], 4
      %s27 = int_to_ptr.vmem [resolvable:$true] %s26
      %29 = dma.hbm_to_vmem [thread:$0]  %s1, 128, %s27, [#allocation6]
    $region9: #{tpu_custom_call.1} parent=1 // pred_fallthru
      _
    // Predicated region
    $region10: #{tpu_custom_call.1} parent=1 // pred_check
      _
    $region11: #{tpu_custom_call.1} parent=1 // pred_check_branch
      %31 = sbr.rel (0) target = $region13
    $region12: #{tpu_custom_call.1} parent=1 // pred_region
      %32 = dma.done [#allocation3], 128
    $region13: #{tpu_custom_call.1} parent=1 // pred_fallthru
      _
    // Predicated region
    $region14: #{tpu_custom_call.1} parent=1 // pred_check
      _
    $region15: #{tpu_custom_call.1} parent=1 // pred_check_branch
      %34 = sbr.rel (0) target = $region17
    $region16: #{tpu_custom_call.1} parent=1 // pred_region
      %35 = dma.done [#allocation6], 128
    $region17: #{tpu_custom_call.1} parent=1 // pred_fallthru
      _
    %v36 = vld [vmem:[#allocation2] sm:$0xff]
    %v37 = vld [vmem:[#allocation5] sm:$0xff]
    %vm38 = vcmp.gt.s32.totalorder %v37, 644245094
    %v39 = vsel %vm38, %v36, 0
    %40 = vst [vmem:[#allocation7] sm:$0xff] %v39
    // Predicated region
    $region18: #{tpu_custom_call.1} parent=1 // pred_check
      _
    $region19: #{tpu_custom_call.1} parent=1 // pred_check_branch
      %42 = sbr.rel (0) target = $region21
    $region20: #{tpu_custom_call.1} parent=1 // pred_region
      %s44 = ssub.s32 128, 128
      %45 = vsyncadd [#allocation4], %s44
      %s47 = sshll.u32 [#allocation7], 4
      %s48 = int_to_ptr.vmem [resolvable:$true] %s47
      %50 = dma.vmem_to_hbm [thread:$0]  %s48, 128, %s2, [#allocation4]
    $region21: #{tpu_custom_call.1} parent=1 // pred_fallthru
      _
    // Predicated region
    $region22: #{tpu_custom_call.1} parent=1 // pred_check
      _
    $region23: #{tpu_custom_call.1} parent=1 // pred_check_branch
      %52 = sbr.rel (0) target = $region25
    $region24: #{tpu_custom_call.1} parent=1 // pred_region
      %53 = dma.done [#allocation4], 128
    $region25: #{tpu_custom_call.1} parent=1 // pred_fallthru
      _
    %54 = vsyncpa [#allocation3], 1
    %55 = vsyncpa [#allocation6], 1
    %56 = vsyncpa [#allocation4], 1

</llo_original>
